<compile_context>
chip_gen: v7x
topology: tpu7x:2x2x1
jax: 0.10.0
libtpu: 0.0.40
codegen_flags: <defaults>
</compile_context>

<pallas_src>
import functools

import jax
import jax.numpy as jnp
from jax.experimental import pallas as pl
from jax.experimental.pallas import tpu as pltpu

EPS = 1e-6
LANE = 128


def _round_up(x, m):
    return (x + m - 1) // m * m


def _gdl_partial_kernel(x_ref, t_ref, out_ref, *, tn, n_total, n_blocks, need_tail_mask):
    """Accumulate per-row lane-partials of sum(t), sum(t*s), sum(s) over feature blocks."""
    j = pl.program_id(1)
    tm = x_ref.shape[0]

    @pl.when(j == 0)
    def _init():
        out_ref[...] = jnp.zeros_like(out_ref)

    def accumulate(num_chunks, last_chunk_valid_lanes):
        # num_chunks / last_chunk_valid_lanes are Python ints -> fully static chunk loop.
        # Lane-partials stay in registers; out_ref is read-modify-written once per step.
        p_t = jnp.zeros((tm, LANE), jnp.float32)
        p_ts = jnp.zeros((tm, LANE), jnp.float32)
        p_s = jnp.zeros((tm, LANE), jnp.float32)
        for k in range(num_chunks):
            sl = slice(k * LANE, (k + 1) * LANE)
            xk = x_ref[:, sl].astype(jnp.float32)
            tk = t_ref[:, sl].astype(jnp.float32)
            # sigmoid(x) = 0.5 * tanh(0.5 * x) + 0.5  (single EUP op + VPU mul/add)
            sk = 0.5 * jnp.tanh(0.5 * xk) + 0.5
            if last_chunk_valid_lanes is not None and k == num_chunks - 1:
                lane = jax.lax.broadcasted_iota(jnp.int32, (tm, LANE), 1)
                valid = lane < last_chunk_valid_lanes
                tk = jnp.where(valid, tk, 0.0)
                sk = jnp.where(valid, sk, 0.0)
            p_t = p_t + tk
            p_ts = p_ts + tk * sk
            p_s = p_s + sk
        out_ref[0] += p_t      # sum(targets)                 (lane partials)
        out_ref[1] += p_ts     # sum(targets * sigmoid(x))    (lane partials)
        out_ref[2] += p_s      # sum(sigmoid(x)); union = sum_t + sum_s

    full_chunks = tn // LANE
    if not need_tail_mask:
        accumulate(full_chunks, None)
    else:
        # Only the last feature block has invalid lanes: interior blocks take the
        # unmasked fast path; fully-invalid tail chunks are skipped statically.
        valid_in_last = n_total - (n_blocks - 1) * tn          # python int in (0, tn)
        tail_chunks = -(-valid_in_last // LANE)
        tail_rem = valid_in_last % LANE

        if n_blocks > 1:
            @pl.when(j < n_blocks - 1)
            def _fast():
                accumulate(full_chunks, None)

        @pl.when(j == n_blocks - 1)
        def _tail():
            accumulate(tail_chunks, tail_rem if tail_rem else None)


def _tpu_vmem_capacity_bytes():
    try:
        return int(pltpu.get_tpu_info().vmem_capacity_bytes)
    except Exception:
        return 64 * 1024 * 1024   # conservative (v7x-sized) fallback


def multi_gen_d_loss(inputs, targets, loss_mask=None, mito_mask=None, *, eps=EPS):
    """Pallas implementation of MultiGenDLoss.forward (default masks only)."""
    # TODO(synk): loss_mask / mito_mask boolean-index paths are not implemented.
    B, C = targets.shape[0], targets.shape[1]
    M = B * C
    x2 = inputs.reshape(M, -1)            # contiguous dim-merge reshapes: no HBM pass
    t2 = targets.reshape(M, -1)           # native dtype; upcast happens in-kernel
    N = x2.shape[1]

    # Generation-aware sizing (128 MiB VMEM on v5e/v6e, 64 MiB on v7x).
    vmem_cap = _tpu_vmem_capacity_bytes()
    if vmem_cap >= 100 * 1024 * 1024:     # v5e / v6e
        vmem_limit = 96 * 1024 * 1024
        pair_target = 16 * 1024 * 1024
    else:                                 # v7x
        vmem_limit = 48 * 1024 * 1024
        pair_target = 8 * 1024 * 1024

    # Row (B*C) tiling: full extent when small, else a multiple of 8 that keeps the
    # three (tm, 128) f32 register accumulators comfortably inside the vreg file.
    TM_MAX = 32
    tm = M if M <= TM_MAX else TM_MAX
    num_m = pl.cdiv(M, tm)

    # Feature tiling: lane-multiple blocks sized to ~pair_target bytes per (x, t) pair,
    # capped at 256 chunks (bounds the static in-kernel unroll) and at the lane-rounded
    # feature extent (never larger than needed -> no wasted DMA).
    bytes_per_col = tm * (x2.dtype.itemsize + t2.dtype.itemsize)
    tn = (pair_target // max(1, bytes_per_col)) // LANE * LANE
    tn = max(LANE, min(tn, 256 * LANE, _round_up(N, LANE)))
    num_n = pl.cdiv(N, tn)
    need_tail_mask = (N % tn) != 0

    kernel = functools.partial(
        _gdl_partial_kernel, tn=tn, n_total=N, n_blocks=num_n,
        need_tail_mask=need_tail_mask)

    partials = pl.pallas_call(
        kernel,
        out_shape=jax.ShapeDtypeStruct((3, M, LANE), jnp.float32),
        grid_spec=pltpu.PrefetchScalarGridSpec(
            num_scalar_prefetch=0,
            grid=(num_m, num_n),
            in_specs=[
                pl.BlockSpec((tm, tn), lambda i, j: (i, j)),
                pl.BlockSpec((tm, tn), lambda i, j: (i, j)),
            ],
            out_specs=pl.BlockSpec((3, tm, LANE), lambda i, j: (0, i, 0)),
        ),
        compiler_params=pltpu.CompilerParams(
            dimension_semantics=("parallel", "arbitrary"),
            vmem_limit_bytes=vmem_limit,
        ),
    )(x2, t2)

    # Tiny finalize: cross-lane reduce on (3, M, 128), per-row weights, scalar combine.
    sums = partials.sum(axis=-1)                    # (3, M)
    sum_t, sum_ts, sum_s = sums[0], sums[1], sums[2]
    weights = 1.0 / (sum_t * sum_t + eps)
    numer = jnp.sum(weights * sum_ts)
    denom = jnp.sum(weights * (sum_t + sum_s))      # sum(t + s) = sum_t + sum_s
    return 1.0 - 2.0 * numer / denom


def _multi_gen_d_loss_ref(inputs, targets, eps=EPS):
    """Pure-JAX reference mirroring the PyTorch forward (finite inputs)."""
    B, C = targets.shape[0], targets.shape[1]
    s = jax.nn.sigmoid(inputs.astype(jnp.float32)).reshape(B, C, -1)
    t = targets.reshape(B, C, -1).astype(jnp.float32)
    w = 1.0 / (jnp.sum(t, axis=-1) ** 2 + eps)
    numer = jnp.sum(w * jnp.sum(t * s, axis=-1))
    denom = jnp.sum(w * jnp.sum(t + s, axis=-1))
    return 1.0 - 2.0 * numer / denom


if __name__ == "__main__":
    key = jax.random.PRNGKey(0)
    k_x, k_t, k_x2, k_t2 = jax.random.split(key, 4)

    # Small NCHW logits/labels pair consistent with the module (N = 256, lane-aligned).
    B, C, H, W = 2, 4, 16, 16
    inputs = jax.random.normal(k_x, (B, C, H, W), dtype=jnp.float32)
    targets = (jax.random.uniform(k_t, (B, C, H, W)) > 0.5).astype(jnp.float32)

    loss = jax.block_until_ready(multi_gen_d_loss(inputs, targets))
    ref = jax.block_until_ready(_multi_gen_d_loss_ref(inputs, targets))
    assert jnp.isfinite(loss), "loss is not finite"
    assert jnp.allclose(loss, ref, rtol=1e-5, atol=1e-6), (loss, ref)

    # Ragged feature count (N = 143, not a lane multiple) exercises the in-kernel
    # tail-mask path that replaced the wrapper-side jnp.pad.
    B2, C2, H2, W2 = 2, 3, 11, 13
    inputs2 = jax.random.normal(k_x2, (B2, C2, H2, W2), dtype=jnp.float32)
    targets2 = (jax.random.uniform(k_t2, (B2, C2, H2, W2)) > 0.5).astype(jnp.float32)

    loss2 = jax.block_until_ready(multi_gen_d_loss(inputs2, targets2))
    ref2 = jax.block_until_ready(_multi_gen_d_loss_ref(inputs2, targets2))
    assert jnp.isfinite(loss2), "ragged-N loss is not finite"
    assert jnp.allclose(loss2, ref2, rtol=1e-5, atol=1e-6), (loss2, ref2)

    print("KERNEL_OK")
</pallas_src>

<mosaic_0001>
module attributes {stable_mosaic.version = 11 : i64} {
  func.func @_gdl_partial_kernel(%arg0: i32, %arg1: i32, %arg2: memref<8x256xf32, #tpu.memory_space<vmem>>, %arg3: memref<8x256xf32, #tpu.memory_space<vmem>>, %arg4: memref<3x8x128xf32, #tpu.memory_space<vmem>>) attributes {dimension_semantics = [#tpu.dimension_semantics<parallel>, #tpu.dimension_semantics<arbitrary>], iteration_bounds = array<i64: 1, 1>, scalar_prefetch = 0 : i64, scratch_operands = 0 : i64, tpu.core_type = #tpu.core_type<tc>, window_params = [{transform_indices = @transform_0, window_bounds = array<i64: 8, 256>}, {transform_indices = @transform_1, window_bounds = array<i64: 8, 256>}, {transform_indices = @transform_2, window_bounds = array<i64: 3, 8, 128>}]} {
    %c0_i32 = arith.constant 0 : i32
    %0 = arith.cmpi eq, %arg1, %c0_i32 : i32
    %1 = arith.extui %0 : i1 to i32
    %c0_i32_0 = arith.constant 0 : i32
    %2 = arith.cmpi ne, %1, %c0_i32_0 : i32
    scf.if %2 {
      %cst_31 = arith.constant 0.000000e+00 : f32
      %50 = vector.broadcast %cst_31 : f32 to vector<3x8x128xf32>
      %c0_32 = arith.constant 0 : index
      %c0_33 = arith.constant 0 : index
      %c0_34 = arith.constant 0 : index
      %51 = vector.load %arg4[%c0_32, %c0_33, %c0_34] : memref<3x8x128xf32, #tpu.memory_space<vmem>>, vector<3x8x128xf32>
      tpu.vector_store %arg4[%c0_32, %c0_33, %c0_34], %50 {strides = array<i32>} : memref<3x8x128xf32, #tpu.memory_space<vmem>>, vector<3x8x128xf32>,
    } else {
    }
    %cst = arith.constant 0.000000e+00 : f32
    %3 = vector.broadcast %cst : f32 to vector<8x128xf32>
    %cst_1 = arith.constant 0.000000e+00 : f32
    %4 = vector.broadcast %cst_1 : f32 to vector<8x128xf32>
    %cst_2 = arith.constant 0.000000e+00 : f32
    %5 = vector.broadcast %cst_2 : f32 to vector<8x128xf32>
    %c0 = arith.constant 0 : index
    %c0_3 = arith.constant 0 : index
    %6 = vector.load %arg2[%c0, %c0_3] : memref<8x256xf32, #tpu.memory_space<vmem>>, vector<8x128xf32>
    %c0_4 = arith.constant 0 : index
    %c0_5 = arith.constant 0 : index
    %7 = vector.load %arg3[%c0_4, %c0_5] : memref<8x256xf32, #tpu.memory_space<vmem>>, vector<8x128xf32>
    %cst_6 = arith.constant 5.000000e-01 : f32
    %8 = vector.broadcast %cst_6 : f32 to vector<8x128xf32>
    %9 = arith.mulf %8, %6 : vector<8x128xf32>
    %10 = math.tanh %9 : vector<8x128xf32>
    %cst_7 = arith.constant 5.000000e-01 : f32
    %11 = vector.broadcast %cst_7 : f32 to vector<8x128xf32>
    %12 = arith.mulf %11, %10 : vector<8x128xf32>
    %cst_8 = arith.constant 5.000000e-01 : f32
    %13 = vector.broadcast %cst_8 : f32 to vector<8x128xf32>
    %14 = arith.addf %12, %13 : vector<8x128xf32>
    %15 = arith.addf %3, %7 : vector<8x128xf32>
    %16 = arith.mulf %7, %14 : vector<8x128xf32>
    %17 = arith.addf %4, %16 : vector<8x128xf32>
    %18 = arith.addf %5, %14 : vector<8x128xf32>
    %c0_9 = arith.constant 0 : index
    %c128 = arith.constant 128 : index
    %19 = vector.load %arg2[%c0_9, %c128] : memref<8x256xf32, #tpu.memory_space<vmem>>, vector<8x128xf32>
    %c0_10 = arith.constant 0 : index
    %c128_11 = arith.constant 128 : index
    %20 = vector.load %arg3[%c0_10, %c128_11] : memref<8x256xf32, #tpu.memory_space<vmem>>, vector<8x128xf32>
    %cst_12 = arith.constant 5.000000e-01 : f32
    %21 = vector.broadcast %cst_12 : f32 to vector<8x128xf32>
    %22 = arith.mulf %21, %19 : vector<8x128xf32>
    %23 = math.tanh %22 : vector<8x128xf32>
    %cst_13 = arith.constant 5.000000e-01 : f32
    %24 = vector.broadcast %cst_13 : f32 to vector<8x128xf32>
    %25 = arith.mulf %24, %23 : vector<8x128xf32>
    %cst_14 = arith.constant 5.000000e-01 : f32
    %26 = vector.broadcast %cst_14 : f32 to vector<8x128xf32>
    %27 = arith.addf %25, %26 : vector<8x128xf32>
    %28 = arith.addf %15, %20 : vector<8x128xf32>
    %29 = arith.mulf %20, %27 : vector<8x128xf32>
    %30 = arith.addf %17, %29 : vector<8x128xf32>
    %31 = arith.addf %18, %27 : vector<8x128xf32>
    %c0_15 = arith.constant 0 : index
    %c0_16 = arith.constant 0 : index
    %c0_17 = arith.constant 0 : index
    %32 = vector.load %arg4[%c0_15, %c0_16, %c0_17] : memref<3x8x128xf32, #tpu.memory_space<vmem>>, vector<1x8x128xf32>
    %33 = vector.shape_cast %32 : vector<1x8x128xf32> to vector<8x128xf32>
    %34 = arith.addf %33, %28 : vector<8x128xf32>
    %c0_18 = arith.constant 0 : index
    %c0_19 = arith.constant 0 : index
    %c0_20 = arith.constant 0 : index
    %35 = vector.load %arg4[%c0_18, %c0_19, %c0_20] : memref<3x8x128xf32, #tpu.memory_space<vmem>>, vector<1x8x128xf32>
    %36 = vector.shape_cast %35 : vector<1x8x128xf32> to vector<8x128xf32>
    %37 = vector.shape_cast %34 : vector<8x128xf32> to vector<1x8x128xf32>
    tpu.vector_store %arg4[%c0_18, %c0_19, %c0_20], %37 {strides = array<i32>} : memref<3x8x128xf32, #tpu.memory_space<vmem>>, vector<1x8x128xf32>,
    %c1 = arith.constant 1 : index
    %c0_21 = arith.constant 0 : index
    %c0_22 = arith.constant 0 : index
    %38 = vector.load %arg4[%c1, %c0_21, %c0_22] : memref<3x8x128xf32, #tpu.memory_space<vmem>>, vector<1x8x128xf32>
    %39 = vector.shape_cast %38 : vector<1x8x128xf32> to vector<8x128xf32>
    %40 = arith.addf %39, %30 : vector<8x128xf32>
    %c1_23 = arith.constant 1 : index
    %c0_24 = arith.constant 0 : index
    %c0_25 = arith.constant 0 : index
    %41 = vector.load %arg4[%c1_23, %c0_24, %c0_25] : memref<3x8x128xf32, #tpu.memory_space<vmem>>, vector<1x8x128xf32>
    %42 = vector.shape_cast %41 : vector<1x8x128xf32> to vector<8x128xf32>
    %43 = vector.shape_cast %40 : vector<8x128xf32> to vector<1x8x128xf32>
    tpu.vector_store %arg4[%c1_23, %c0_24, %c0_25], %43 {strides = array<i32>} : memref<3x8x128xf32, #tpu.memory_space<vmem>>, vector<1x8x128xf32>,
    %c2 = arith.constant 2 : index
    %c0_26 = arith.constant 0 : index
    %c0_27 = arith.constant 0 : index
    %44 = vector.load %arg4[%c2, %c0_26, %c0_27] : memref<3x8x128xf32, #tpu.memory_space<vmem>>, vector<1x8x128xf32>
    %45 = vector.shape_cast %44 : vector<1x8x128xf32> to vector<8x128xf32>
    %46 = arith.addf %45, %31 : vector<8x128xf32>
    %c2_28 = arith.constant 2 : index
    %c0_29 = arith.constant 0 : index
    %c0_30 = arith.constant 0 : index
    %47 = vector.load %arg4[%c2_28, %c0_29, %c0_30] : memref<3x8x128xf32, #tpu.memory_space<vmem>>, vector<1x8x128xf32>
    %48 = vector.shape_cast %47 : vector<1x8x128xf32> to vector<8x128xf32>
    %49 = vector.shape_cast %46 : vector<8x128xf32> to vector<1x8x128xf32>
    tpu.vector_store %arg4[%c2_28, %c0_29, %c0_30], %49 {strides = array<i32>} : memref<3x8x128xf32, #tpu.memory_space<vmem>>, vector<1x8x128xf32>,
    return
  }
  func.func @transform_0(%arg0: i32, %arg1: i32) -> (i32, i32) {
    %c0_i32 = arith.constant 0 : i32
    return %arg0, %arg1 : i32, i32
  }
  func.func @transform_1(%arg0: i32, %arg1: i32) -> (i32, i32) {
    %c0_i32 = arith.constant 0 : i32
    return %arg0, %arg1 : i32, i32
  }
  func.func @transform_2(%arg0: i32, %arg1: i32) -> (i32, i32, i32) {
    %c0_i32 = arith.constant 0 : i32
    %c0_i32_0 = arith.constant 0 : i32
    %c0_i32_1 = arith.constant 0 : i32
    return %c0_i32, %arg0, %c0_i32_0 : i32, i32, i32
  }
}

</mosaic_0001>

<llo_original>
// kernel: tpu_custom_call.1
$region0: #{tpu_custom_call.1}
  #allocation0 [shape = 'u32[]', space=smem, size = 0x4, offset = 0x4, fixed_abs, tag = 'smem constant byte address 0x4 - core index']
  #allocation1 [shape = 'u32[144,128]{1,0:T(1,128)}', space=vmem, size = 0x12000, scoped, tag = 'internal scratch']
  %s0 = inlined_call_operand.hbm [shape: f32[8,256], index: 0, kind: input, shape index: {}]
  %s1 = inlined_call_operand.hbm [shape: f32[8,256], index: 1, kind: input, shape index: {}]
  %s2 = inlined_call_operand.hbm [shape: f32[3,8,128], index: 2, kind: output, shape index: {}]
  %s3 = sld [smem:[#allocation0]]
  $region30: #{tpu_custom_call.1} parent=0
    _
  %s5 = ssub.s32 1, %s3
  %s6 = scalar_select 0, %s5, %s3
  $region1: #{tpu_custom_call.1} parent=0
    #allocation2 [shape = 'u8[8192]{0}', space=vmem, size = 0x2000, scoped, tag = 'input window, operand 0, single buffered']
    #allocation3 [shape = 's32[1]{0}', space=sflag, size = 0x4, scoped, tag = 'scoped memory for tpu_custom_call.1']
    #allocation4 [shape = 's32[1]{0}', space=sflag, size = 0x4, scoped, tag = 'scoped memory for tpu_custom_call.1']
    #allocation5 [shape = 'u8[8192]{0}', space=vmem, size = 0x2000, scoped, tag = 'input window, operand 1, single buffered']
    #allocation6 [shape = 's32[1]{0}', space=sflag, size = 0x4, scoped, tag = 'scoped memory for tpu_custom_call.1']
    #allocation7 [shape = 'u8[12288]{0}', space=vmem, size = 0x3000, scoped, tag = 'output window, operand 0, single buffered']
    %7 = vsyncpa [#allocation3], 0
    %8 = vsyncpa [#allocation6], 0
    %9 = vsyncpa [#allocation4], 0
    // Predicated region
    $region2: #{tpu_custom_call.1} parent=1 // pred_check
      _
    $region3: #{tpu_custom_call.1} parent=1 // pred_check_branch
      %11 = sbr.rel (0) target = $region5
    $region4: #{tpu_custom_call.1} parent=1 // pred_region
      %s13 = ssub.s32 256, 256
      %14 = vsyncadd [#allocation3], %s13
      %s16 = sshll.u32 [#allocation2], 4
      %s17 = int_to_ptr.vmem [resolvable:$true] %s16
      %19 = dma.hbm_to_vmem [thread:$0]  %s0, 256, %s17, [#allocation3]
    $region5: #{tpu_custom_call.1} parent=1 // pred_fallthru
      _
    // Predicated region
    $region6: #{tpu_custom_call.1} parent=1 // pred_check
      _
    $region7: #{tpu_custom_call.1} parent=1 // pred_check_branch
      %21 = sbr.rel (0) target = $region9
    $region8: #{tpu_custom_call.1} parent=1 // pred_region
      %s23 = ssub.s32 256, 256
      %24 = vsyncadd [#allocation6], %s23
      %s26 = sshll.u32 [#allocation5], 4
      %s27 = int_to_ptr.vmem [resolvable:$true] %s26
      %29 = dma.hbm_to_vmem [thread:$0]  %s1, 256, %s27, [#allocation6]
    $region9: #{tpu_custom_call.1} parent=1 // pred_fallthru
      _
    // Predicated region
    $region10: #{tpu_custom_call.1} parent=1 // pred_check
      _
    $region11: #{tpu_custom_call.1} parent=1 // pred_check_branch
      %31 = sbr.rel (0) target = $region13
    $region12: #{tpu_custom_call.1} parent=1 // pred_region
      %32 = dma.done [#allocation3], 256
    $region13: #{tpu_custom_call.1} parent=1 // pred_fallthru
      _
    // Predicated region
    $region14: #{tpu_custom_call.1} parent=1 // pred_check
      _
    $region15: #{tpu_custom_call.1} parent=1 // pred_check_branch
      %34 = sbr.rel (0) target = $region17
    $region16: #{tpu_custom_call.1} parent=1 // pred_region
      %35 = dma.done [#allocation6], 256
    $region17: #{tpu_custom_call.1} parent=1 // pred_fallthru
      _
    %p36 = scmp.eq.s32.totalorder 0, 0
    // Predicated region
    $region18: #{tpu_custom_call.1} parent=1 // pred_check
      %p37 = pneg %p36
    $region19: #{tpu_custom_call.1} parent=1 // pred_check_branch
      %39 = sbr.rel (%p37) target = $region21
    $region20: #{tpu_custom_call.1} parent=1 // pred_region
      %40 = vst [vmem:[#allocation7] sm:$0xff] 0.0
      %41 = vst [vmem:[#allocation7 + $0x8] sm:$0xff] 0.0
      %42 = vst [vmem:[#allocation7 + $0x10] sm:$0xff] 0.0
    $region21: #{tpu_custom_call.1} parent=1 // pred_fallthru
      _
    %v43 = vld [vmem:[#allocation2] sm:$0xff]
    %v44 = vld [vmem:[#allocation5] sm:$0xff]
    %v45 = vmul.f32 %v43, 0.5
    %v46 = vtanh.pop %v45
    %v47 = vmul.f32 %v46, 0.5
    %v48 = vadd.f32 %v47, 0.5
    %v49 = vadd.f32 %v44, 0.0
    %v50 = vmul.f32 %v44, %v48
    %v51 = vadd.f32 %v50, 0.0
    %v52 = vadd.f32 %v48, 0.0
    %v53 = vld [vmem:[#allocation2 + $0x8] sm:$0xff]
    %v54 = vld [vmem:[#allocation5 + $0x8] sm:$0xff]
    %v55 = vmul.f32 %v53, 0.5
    %v56 = vtanh.pop %v55
    %v57 = vmul.f32 %v56, 0.5
    %v58 = vadd.f32 %v57, 0.5
    %v59 = vadd.f32 %v49, %v54
    %v60 = vmul.f32 %v54, %v58
    %v61 = vadd.f32 %v51, %v60
    %v62 = vadd.f32 %v52, %v58
    %v63 = vld [vmem:[#allocation7] sm:$0xff]
    %v64 = vadd.f32 %v63, %v59
    %65 = vst [vmem:[#allocation7] sm:$0xff] %v64
    %s66 = scalar_lea.vmem [#allocation7], 8
    %v67 = vld [vmem:[%s66] sm:$0xff]
    %v68 = vadd.f32 %v67, %v61
    %69 = vst [vmem:[%s66] sm:$0xff] %v68
    %s70 = scalar_lea.vmem [#allocation7], 16
    %v71 = vld [vmem:[%s70] sm:$0xff]
    %v72 = vadd.f32 %v71, %v62
    %73 = vst [vmem:[%s70] sm:$0xff] %v72
    // Predicated region
    $region22: #{tpu_custom_call.1} parent=1 // pred_check
      _
    $region23: #{tpu_custom_call.1} parent=1 // pred_check_branch
      %75 = sbr.rel (0) target = $region25
    $region24: #{tpu_custom_call.1} parent=1 // pred_region
      %s77 = ssub.s32 384, 384
      %78 = vsyncadd [#allocation4], %s77
      %s79 = sshll.u32 [#allocation7], 4
      %s80 = int_to_ptr.vmem [resolvable:$true] %s79
      %85 = dma.vmem_to_hbm [thread:$0]  %s80, 384, %s2, [#allocation4], 128, 128, 8
    $region25: #{tpu_custom_call.1} parent=1 // pred_fallthru
      _
    // Predicated region
    $region26: #{tpu_custom_call.1} parent=1 // pred_check
      _
    $region27: #{tpu_custom_call.1} parent=1 // pred_check_branch
      %87 = sbr.rel (0) target = $region29
    $region28: #{tpu_custom_call.1} parent=1 // pred_region
      %88 = dma.done [#allocation4], 384
    $region29: #{tpu_custom_call.1} parent=1 // pred_fallthru
      _
    %89 = vsyncpa [#allocation3], 1
    %90 = vsyncpa [#allocation6], 1
    %91 = vsyncpa [#allocation4], 1

</llo_original>
